<compile_context>
chip_gen: v7x
topology: tpu7x:2x2x1
jax: 0.10.0
libtpu: 0.0.40
codegen_flags: <defaults>
</compile_context>

<pallas_src>
import math

import jax
import jax.numpy as jnp
from jax.experimental import pallas as pl
from jax.experimental.pallas import tpu as pltpu


def _round_up(v, m):
    return (v + m - 1) // m * m


# ----------------------------- Pallas kernel --------------------------------
def _encodings_kernel(x_ref, pe_ref, te_ref, w1pe_ref, w2_ref, b2_ref,
                      o_ref, hpre_ref):
    # Shapes (pixels on lanes):
    #   x_ref   : (C, Tp)         input pixels for this (pixel-tile, batch)
    #   pe_ref  : (Cin_pad, Tp)   positional-encoding table block (mxu dtype)
    #   te_ref  : (4C, 1)         te @ W1_te^T + b1 for this batch (f32)
    #   w1pe_ref: (4C, Cin_pad)   conv1 weight, PE half (mxu dtype)
    #   w2_ref  : (2C, 4C)        merged conv2 weight (mxu dtype)
    #   b2_ref  : (2C, 1)         conv2 bias (f32)
    #   o_ref   : (C, Tp)
    #   hpre_ref: (4C, Tp) f32 scratch, batch-invariant conv1(PE) product.
    bi = pl.program_id(1)          # batch index (innermost grid axis)

    @pl.when(bi == 0)
    def _():
        # Batch-invariant: recompute only when the pixel tile changes.
        hpre_ref[...] = jnp.dot(w1pe_ref[...], pe_ref[...],
                                preferred_element_type=jnp.float32)

    h = jnp.maximum(hpre_ref[...] + te_ref[...], 0.0)          # conv1 + ReLU
    y = jnp.dot(w2_ref[...], h.astype(w2_ref.dtype),
                preferred_element_type=jnp.float32) + b2_ref[...]  # (2C, Tp)
    c = o_ref.shape[0]
    # Row (sublane) slice: free when C % 8 == 0, always correct.
    o_ref[...] = x_ref[...] * y[:c, :] + y[c:, :]


# ------------------------- sizing / budget helpers ---------------------------
def _vmem_budget_bytes():
    """Generation-aware scoped-VMEM budget (~half of physical, capped).

    v5e/v6e (128 MiB physical) -> 48 MiB; v7x (64 MiB physical) -> 32 MiB.
    Falls back to a conservative 32 MiB if the hardware query is unavailable.
    """
    try:
        cap = int(pltpu.get_tpu_info().vmem_capacity_bytes)
    except Exception:
        return 32 * 1024 * 1024
    return int(min(max(cap // 2, 16 * 1024 * 1024), 48 * 1024 * 1024))


def _choose_tile_pixels(c, c_in, hw, requested, mxu_itemsize, vmem_budget):
    hidden, c2 = 4 * c, 2 * c
    # Constant-index weight/bias blocks (double-buffered by the pipeline).
    weight_bytes = (2 * (hidden * c_in + c2 * hidden) * mxu_itemsize
                    + 2 * (hidden + c2) * 4)
    # Per-pixel bytes: x/out f32 double-buffered blocks, PE stream
    # (double-buffered, mxu dtype), h_pre f32 scratch, in-kernel temporaries
    # (ReLU result, bf16 cast, y, epilogue).
    per_pixel = (4 * 4 * c            # x  (2 bufs, f32)
                 + 4 * 4 * c          # out(2 bufs, f32)
                 + 2 * mxu_itemsize * c_in   # PE (2 bufs)
                 + 4 * 4 * c          # h_pre scratch
                 + 4 * 12 * c)        # temporaries
    budget = max(vmem_budget - weight_bytes - (4 << 20), 2 << 20)
    cap = max(128, (budget // per_pixel) // 128 * 128)
    tp = min(requested, cap, _round_up(hw, 128))
    return max(128, (tp // 128) * 128)


# ------------------------------ pallas_call ----------------------------------
def _encodings_pallas(x_flat, pe, te_col, w1_pe, w2, b2_col, *,
                      tile_pixels, vmem_limit):
    b, c, hw = x_flat.shape
    c_in = pe.shape[0]            # padded conv1 contraction dim (mult. of 8)
    hidden = w1_pe.shape[0]       # 4C
    c2 = w2.shape[0]              # 2C
    n_tiles = hw // tile_pixels

    grid_spec = pltpu.PrefetchScalarGridSpec(
        num_scalar_prefetch=0,
        grid=(n_tiles, b),        # batch innermost -> PE block reused B times
        in_specs=[
            pl.BlockSpec((None, c, tile_pixels), lambda j, bi: (bi, 0, j)),  # x
            pl.BlockSpec((c_in, tile_pixels),    lambda j, bi: (0, j)),      # PE
            pl.BlockSpec((None, hidden, 1),      lambda j, bi: (bi, 0, 0)),  # TE@W1+b1
            pl.BlockSpec((hidden, c_in),         lambda j, bi: (0, 0)),      # W1_pe
            pl.BlockSpec((c2, hidden),           lambda j, bi: (0, 0)),      # W2 (merged)
            pl.BlockSpec((c2, 1),                lambda j, bi: (0, 0)),      # b2
        ],
        out_specs=pl.BlockSpec((None, c, tile_pixels), lambda j, bi: (bi, 0, j)),
        scratch_shapes=[pltpu.VMEM((hidden, tile_pixels), jnp.float32)],
    )
    return pl.pallas_call(
        _encodings_kernel,
        out_shape=jax.ShapeDtypeStruct((b, c, hw), jnp.float32),
        grid_spec=grid_spec,
        compiler_params=pltpu.CompilerParams(
            dimension_semantics=("parallel", "arbitrary"),
            vmem_limit_bytes=int(vmem_limit),
        ),
    )(x_flat, pe, te_col, w1_pe, w2, b2_col)


# -------------------------- encoding glue (plain JAX) ------------------------
def positional_encoding_2d(channels, h, w):
    # Standard 2D sinusoidal PE: first half of channels encodes width position,
    # second half encodes height position (sin/cos interleaved). Returns (C,H,W).
    if channels % 4 != 0:
        raise ValueError("positional_encoding_2d requires channels % 4 == 0")
    half = channels // 2
    div = jnp.exp(jnp.arange(0, half, 2, dtype=jnp.float32)
                  * (-math.log(10000.0) / half))                 # (half//2,)
    pos_w = jnp.arange(w, dtype=jnp.float32)[:, None]            # (w, 1)
    pos_h = jnp.arange(h, dtype=jnp.float32)[:, None]            # (h, 1)
    sin_w = jnp.sin(pos_w * div).T                               # (half//2, w)
    cos_w = jnp.cos(pos_w * div).T
    sin_h = jnp.sin(pos_h * div).T                               # (half//2, h)
    cos_h = jnp.cos(pos_h * div).T
    q = half // 2
    pe = jnp.zeros((channels, h, w), jnp.float32)
    pe = pe.at[0:half:2].set(jnp.broadcast_to(sin_w[:, None, :], (q, h, w)))
    pe = pe.at[1:half:2].set(jnp.broadcast_to(cos_w[:, None, :], (q, h, w)))
    pe = pe.at[half::2].set(jnp.broadcast_to(sin_h[:, :, None], (q, h, w)))
    pe = pe.at[half + 1::2].set(jnp.broadcast_to(cos_h[:, :, None], (q, h, w)))
    return pe


def time_encoding(t, channels):
    # Standard sinusoidal timestep embedding, (B, C).
    half = channels // 2
    freqs = jnp.exp(-math.log(10000.0)
                    * jnp.arange(half, dtype=jnp.float32) / half)
    args = t.astype(jnp.float32)[:, None] * freqs[None, :]
    return jnp.concatenate([jnp.sin(args), jnp.cos(args)], axis=1)


def encodings_forward(x, t, params, *, tile_pixels=2048,
                      mxu_dtype=jnp.bfloat16):
    """x: (B, C, H, W) NCHW, t: (B,).  mxu_dtype: dtype for PE/weight streams."""
    b, c, h, w = x.shape
    hw = h * w
    hidden = 4 * c
    c2 = 2 * c

    # Small tables -- tiny compared to the (B*H*W, 2C) tensor they replace.
    pe = positional_encoding_2d(c, h, w).reshape(c, hw)          # (C, HW)
    te = time_encoding(t, c)                                     # (B, C)

    w1, b1, w2, b2 = params["w1"], params["b1"], params["w2"], params["b2"]
    w1_pe = w1[:, :c]                                            # (4C, C)
    # TE contribution to conv1 with its bias folded in: one column per batch.
    te_col = (te @ w1[:, c:].T + b1).reshape(b, hidden, 1).astype(jnp.float32)
    b2_col = b2.reshape(c2, 1).astype(jnp.float32)               # merged conv2 bias

    # Zero-pad the conv1 contraction dim to a sublane multiple (MXU-friendly).
    c_in = _round_up(c, 8)
    if c_in != c:
        pe = jnp.pad(pe, ((0, c_in - c), (0, 0)))
        w1_pe = jnp.pad(w1_pe, ((0, 0), (0, c_in - c)))

    # MXU-input dtype (bf16 halves PE HBM stream + weight VMEM; f32 accumulate).
    pe = pe.astype(mxu_dtype)
    w1_pe = w1_pe.astype(mxu_dtype)
    w2_m = w2.astype(mxu_dtype)

    # Pixels-on-lanes layout: reshape of contiguous NCHW (no relayout copy).
    x_flat = x.reshape(b, c, hw).astype(jnp.float32)

    vmem_budget = _vmem_budget_bytes()
    tp = _choose_tile_pixels(c, c_in, hw, tile_pixels,
                             jnp.dtype(mxu_dtype).itemsize, vmem_budget)
    hw_pad = _round_up(hw, tp)
    if hw_pad != hw:   # tail handling: pad pixels instead of requiring divisibility
        x_flat = jnp.pad(x_flat, ((0, 0), (0, 0), (0, hw_pad - hw)))
        pe = jnp.pad(pe, ((0, 0), (0, hw_pad - hw)))

    out = _encodings_pallas(x_flat, pe, te_col, w1_pe, w2_m, b2_col,
                            tile_pixels=tp, vmem_limit=vmem_budget)
    if hw_pad != hw:
        out = out[:, :, :hw]
    return out.reshape(b, c, h, w)


def init_params(key, channels):
    c2, c4 = 2 * channels, 4 * channels
    k1, k2, k3, k4 = jax.random.split(key, 4)
    # Conv2d(2C,4C,1) weight squeezed -> (4C, 2C); Conv2d(4C,2C,1) -> (2C, 4C).
    return dict(
        w1=jax.random.normal(k1, (c4, c2), jnp.float32) * 0.1,
        b1=jax.random.normal(k2, (c4,), jnp.float32) * 0.1,
        w2=jax.random.normal(k3, (c2, c4), jnp.float32) * 0.1,
        b2=jax.random.normal(k4, (c2,), jnp.float32) * 0.1,
    )


def _reference(x, t, params):
    # Pure-JAX reference mirroring the PyTorch module.
    b, c, h, w = x.shape
    pe = jnp.broadcast_to(positional_encoding_2d(c, h, w)[None], (b, c, h, w))
    te = jnp.broadcast_to(time_encoding(t, c)[:, :, None, None], (b, c, h, w))
    embs = jnp.concatenate([pe, te], axis=1)                       # (B, 2C, H, W)
    h1 = jnp.einsum("fk,bkhw->bfhw", params["w1"], embs) \
        + params["b1"][None, :, None, None]
    h1 = jnp.maximum(h1, 0.0)
    y = jnp.einsum("of,bfhw->bohw", params["w2"], h1) \
        + params["b2"][None, :, None, None]
    mul, bias = y[:, :c], y[:, c:]
    return x * mul + bias


if __name__ == "__main__":
    key = jax.random.PRNGKey(0)

    def run_case(idx, B, C, H, W, *, tile_pixels=2048,
                 mxu_dtype=jnp.float32, atol=1e-5, rtol=1e-5):
        k = jax.random.fold_in(key, idx)
        kx, kt, kp = jax.random.split(k, 3)
        x = jax.random.normal(kx, (B, C, H, W), jnp.float32)
        t = jax.random.randint(kt, (B,), 0, 1000).astype(jnp.float32)
        params = init_params(kp, C)
        out = jax.block_until_ready(
            encodings_forward(x, t, params, tile_pixels=tile_pixels,
                              mxu_dtype=mxu_dtype))
        ref = _reference(x, t, params)
        assert out.shape == x.shape
        err = float(jnp.max(jnp.abs(out - ref)))
        assert jnp.allclose(out, ref, atol=atol, rtol=rtol), (idx, err)

    # 1) Baseline small case, exact f32 path (tight tolerance).
    run_case(0, 2, 4, 16, 16, mxu_dtype=jnp.float32, atol=1e-5, rtol=1e-5)
    # 2) bf16 MXU-input path (production default), loose tolerance.
    run_case(1, 2, 4, 16, 16, mxu_dtype=jnp.bfloat16, atol=5e-2, rtol=5e-2)
    # 3) Padding paths: C % 8 != 0, HW tail pad, multiple pixel tiles,
    #    batch-innermost h_pre reuse.
    run_case(2, 2, 12, 20, 20, tile_pixels=128, mxu_dtype=jnp.float32,
             atol=1e-5, rtol=1e-5)

    print("KERNEL_OK")
</pallas_src>

<mosaic_0001>
module attributes {stable_mosaic.version = 11 : i64} {
  func.func @_encodings_kernel(%arg0: i32, %arg1: i32, %arg2: memref<1x4x256xf32, #tpu.memory_space<vmem>>, %arg3: memref<8x256xf32, #tpu.memory_space<vmem>>, %arg4: memref<1x16x1xf32, #tpu.memory_space<vmem>>, %arg5: memref<16x8xf32, #tpu.memory_space<vmem>>, %arg6: memref<8x16xf32, #tpu.memory_space<vmem>>, %arg7: memref<8x1xf32, #tpu.memory_space<vmem>>, %arg8: memref<1x4x256xf32, #tpu.memory_space<vmem>>, %arg9: memref<16x256xf32, #tpu.memory_space<vmem>>) attributes {dimension_semantics = [#tpu.dimension_semantics<parallel>, #tpu.dimension_semantics<arbitrary>], iteration_bounds = array<i64: 1, 2>, scalar_prefetch = 0 : i64, scratch_operands = 1 : i64, tpu.core_type = #tpu.core_type<tc>, window_params = [{transform_indices = @transform_0, window_bounds = array<i64: 1, 4, 256>}, {transform_indices = @transform_1, window_bounds = array<i64: 8, 256>}, {transform_indices = @transform_2, window_bounds = array<i64: 1, 16, 1>}, {pipeline_mode = #tpu.pipeline_mode<synchronous>, transform_indices = @transform_3, window_bounds = array<i64: 16, 8>}, {pipeline_mode = #tpu.pipeline_mode<synchronous>, transform_indices = @transform_4, window_bounds = array<i64: 8, 16>}, {pipeline_mode = #tpu.pipeline_mode<synchronous>, transform_indices = @transform_5, window_bounds = array<i64: 8, 1>}, {transform_indices = @transform_6, window_bounds = array<i64: 1, 4, 256>}]} {
    %c0_i32 = arith.constant 0 : i32
    %0 = arith.cmpi eq, %arg1, %c0_i32 : i32
    %1 = arith.extui %0 : i1 to i32
    %c0_i32_0 = arith.constant 0 : i32
    %2 = arith.cmpi ne, %1, %c0_i32_0 : i32
    scf.if %2 {
      %c0_16 = arith.constant 0 : index
      %c0_17 = arith.constant 0 : index
      %24 = vector.load %arg5[%c0_16, %c0_17] : memref<16x8xf32, #tpu.memory_space<vmem>>, vector<16x8xf32>
      %c0_18 = arith.constant 0 : index
      %c0_19 = arith.constant 0 : index
      %25 = vector.load %arg3[%c0_18, %c0_19] : memref<8x256xf32, #tpu.memory_space<vmem>>, vector<8x256xf32>
      %cst_20 = arith.constant dense<0.000000e+00> : vector<16x256xf32>
      %26 = tpu.matmul %24, %25, %cst_20 {dimension_numbers = #tpu.dot_dimension_numbers<[1], [0], [0], [1], [0, 0, 1, 1], [], []>} : vector<16x8xf32>, vector<8x256xf32>, vector<16x256xf32> -> vector<16x256xf32>
      %c0_21 = arith.constant 0 : index
      %c0_22 = arith.constant 0 : index
      %27 = vector.load %arg9[%c0_21, %c0_22] : memref<16x256xf32, #tpu.memory_space<vmem>>, vector<16x256xf32>
      tpu.vector_store %arg9[%c0_21, %c0_22], %26 {strides = array<i32>} : memref<16x256xf32, #tpu.memory_space<vmem>>, vector<16x256xf32>,
    } else {
    }
    %c0 = arith.constant 0 : index
    %c0_1 = arith.constant 0 : index
    %3 = vector.load %arg9[%c0, %c0_1] : memref<16x256xf32, #tpu.memory_space<vmem>>, vector<16x256xf32>
    %c0_2 = arith.constant 0 : index
    %c0_3 = arith.constant 0 : index
    %c0_4 = arith.constant 0 : index
    %4 = vector.load %arg4[%c0_2, %c0_3, %c0_4] : memref<1x16x1xf32, #tpu.memory_space<vmem>>, vector<1x16x1xf32>
    %5 = vector.shape_cast %4 : vector<1x16x1xf32> to vector<16x1xf32>
    %6 = vector.broadcast %5 : vector<16x1xf32> to vector<16x256xf32>
    %7 = arith.addf %3, %6 : vector<16x256xf32>
    %cst = arith.constant 0.000000e+00 : f32
    %8 = vector.broadcast %cst : f32 to vector<16x256xf32>
    %9 = arith.maximumf %7, %8 : vector<16x256xf32>
    %c0_5 = arith.constant 0 : index
    %c0_6 = arith.constant 0 : index
    %10 = vector.load %arg6[%c0_5, %c0_6] : memref<8x16xf32, #tpu.memory_space<vmem>>, vector<8x16xf32>
    %cst_7 = arith.constant dense<0.000000e+00> : vector<8x256xf32>
    %11 = tpu.matmul %10, %9, %cst_7 {dimension_numbers = #tpu.dot_dimension_numbers<[1], [0], [0], [1], [0, 0, 1, 1], [], []>} : vector<8x16xf32>, vector<16x256xf32>, vector<8x256xf32> -> vector<8x256xf32>
    %c0_8 = arith.constant 0 : index
    %c0_9 = arith.constant 0 : index
    %12 = vector.load %arg7[%c0_8, %c0_9] : memref<8x1xf32, #tpu.memory_space<vmem>>, vector<8x1xf32>
    %13 = vector.broadcast %12 : vector<8x1xf32> to vector<8x256xf32>
    %14 = arith.addf %11, %13 : vector<8x256xf32>
    %c0_10 = arith.constant 0 : index
    %c0_11 = arith.constant 0 : index
    %c0_12 = arith.constant 0 : index
    %15 = vector.load %arg2[%c0_10, %c0_11, %c0_12] : memref<1x4x256xf32, #tpu.memory_space<vmem>>, vector<1x4x256xf32>
    %16 = vector.shape_cast %15 : vector<1x4x256xf32> to vector<4x256xf32>
    %17 = vector.extract_strided_slice %14 {offsets = [0, 0], sizes = [4, 256], strides = [1, 1]} : vector<8x256xf32> to vector<4x256xf32>
    %18 = arith.mulf %16, %17 : vector<4x256xf32>
    %19 = vector.extract_strided_slice %14 {offsets = [4, 0], sizes = [4, 256], strides = [1, 1]} : vector<8x256xf32> to vector<4x256xf32>
    %20 = arith.addf %18, %19 : vector<4x256xf32>
    %c0_13 = arith.constant 0 : index
    %c0_14 = arith.constant 0 : index
    %c0_15 = arith.constant 0 : index
    %21 = vector.load %arg8[%c0_13, %c0_14, %c0_15] : memref<1x4x256xf32, #tpu.memory_space<vmem>>, vector<1x4x256xf32>
    %22 = vector.shape_cast %21 : vector<1x4x256xf32> to vector<4x256xf32>
    %23 = vector.shape_cast %20 : vector<4x256xf32> to vector<1x4x256xf32>
    tpu.vector_store %arg8[%c0_13, %c0_14, %c0_15], %23 {strides = array<i32>} : memref<1x4x256xf32, #tpu.memory_space<vmem>>, vector<1x4x256xf32>,
    return
  }
  func.func @transform_0(%arg0: i32, %arg1: i32) -> (i32, i32, i32) {
    %c0_i32 = arith.constant 0 : i32
    %c0_i32_0 = arith.constant 0 : i32
    return %arg1, %c0_i32, %arg0 : i32, i32, i32
  }
  func.func @transform_1(%arg0: i32, %arg1: i32) -> (i32, i32) {
    %c0_i32 = arith.constant 0 : i32
    %c0_i32_0 = arith.constant 0 : i32
    return %c0_i32, %arg0 : i32, i32
  }
  func.func @transform_2(%arg0: i32, %arg1: i32) -> (i32, i32, i32) {
    %c0_i32 = arith.constant 0 : i32
    %c0_i32_0 = arith.constant 0 : i32
    %c0_i32_1 = arith.constant 0 : i32
    return %arg1, %c0_i32, %c0_i32_0 : i32, i32, i32
  }
  func.func @transform_3(%arg0: i32, %arg1: i32) -> (i32, i32) {
    %c0_i32 = arith.constant 0 : i32
    %c0_i32_0 = arith.constant 0 : i32
    %c0_i32_1 = arith.constant 0 : i32
    return %c0_i32, %c0_i32_0 : i32, i32
  }
  func.func @transform_4(%arg0: i32, %arg1: i32) -> (i32, i32) {
    %c0_i32 = arith.constant 0 : i32
    %c0_i32_0 = arith.constant 0 : i32
    %c0_i32_1 = arith.constant 0 : i32
    return %c0_i32, %c0_i32_0 : i32, i32
  }
  func.func @transform_5(%arg0: i32, %arg1: i32) -> (i32, i32) {
    %c0_i32 = arith.constant 0 : i32
    %c0_i32_0 = arith.constant 0 : i32
    %c0_i32_1 = arith.constant 0 : i32
    return %c0_i32, %c0_i32_0 : i32, i32
  }
  func.func @transform_6(%arg0: i32, %arg1: i32) -> (i32, i32, i32) {
    %c0_i32 = arith.constant 0 : i32
    %c0_i32_0 = arith.constant 0 : i32
    return %arg1, %c0_i32, %arg0 : i32, i32, i32
  }
}

</mosaic_0001>

<llo_original>
// kernel: tpu_custom_call.1
$region0: #{tpu_custom_call.1}
  #allocation0 [shape = 'u32[]', space=smem, size = 0x4, offset = 0x4, fixed_abs, tag = 'smem constant byte address 0x4 - core index']
  #allocation1 [shape = 'u32[144,128]{1,0:T(1,128)}', space=vmem, size = 0x12000, scoped, tag = 'internal scratch']
  #allocation2 [shape = 'f32[16,256]{1,0:T(8,128)}', space=vmem, size = 0x4000, scoped, tag = 'scratch operand']
  %s0 = inlined_call_operand.vmem [shape: f32[2,4,256], index: 0, kind: input, shape index: {}]
  %s1 = inlined_call_operand.vmem [shape: f32[8,256], index: 1, kind: input, shape index: {}]
  %s2 = inlined_call_operand.vmem [shape: f32[2,16,1], index: 2, kind: input, shape index: {}]
  %s3 = inlined_call_operand.vmem [shape: f32[16,8], index: 3, kind: input, shape index: {}]
  %s4 = inlined_call_operand.vmem [shape: f32[8,16], index: 4, kind: input, shape index: {}]
  %s5 = inlined_call_operand.vmem [shape: f32[8,1], index: 5, kind: input, shape index: {}]
  %s6 = inlined_call_operand.hbm [shape: f32[2,4,256], index: 6, kind: output, shape index: {}]
  %s7 = sld [smem:[#allocation0]]
  $region61: #{tpu_custom_call.1} parent=0
    _
  %s9 = ssub.s32 1, %s7
  %s10 = scalar_select 0, %s9, %s7
  $region1: #{tpu_custom_call.1} parent=0
    #allocation3 [shape = 'u8[8192]{0}', space=vmem, size = 0x2000, scoped, tag = 'output window, operand 0']
    #allocation4 [shape = 's32[2]{0}', space=sflag, size = 0x8, scoped, tag = 'scoped memory for tpu_custom_call.1']
    %11 = vsyncpa [#allocation4], 0
    %s12 = scalar_lea.sflag [#allocation4], 1
    %13 = vsyncpa %s12, 0
    loop: start=0, step=1, limit=4
    $region2: #{tpu_custom_call.1} parent=1 // loop_pre_header
      _
    $region3: #{tpu_custom_call.1} parent=1 // loop_header
      %s15 = sphi 0, %s19
      %p16 = scmp.ge.s32.totalorder %s15, 4
      %s22 = sphi 0, %s34
      %s23 = sphi 0, %s30
      %s24 = sphi 0, %s22
      %s25 = sphi 0, %s23
      %s26 = sphi 0, %s24
      %s27 = sphi 0, %s25
      %s39 = sphi 0, %s41
      %s42 = sphi 0, %s39
      %s43 = sphi 0, %s42
      %s59 = sphi 0, %s43
      %s65 = sphi 0, %s67
      %s68 = sphi 0, %s65
      %s69 = sphi 0, %s68
      %s85 = sphi 0, %s69
      %s91 = sphi 0, %s93
      %s94 = sphi 0, %s91
      %s95 = sphi 0, %s94
      %s111 = sphi 0, %s95
      %s115 = sphi 0, %s115
      %s117 = sphi 0, %s115
      %s118 = sphi 0, %s117
      %s132 = sphi 0, %s118
      %s136 = sphi 0, %s136
      %s138 = sphi 0, %s136
      %s139 = sphi 0, %s138
      %s153 = sphi 0, %s139
      %s157 = sphi 0, %s157
      %s159 = sphi 0, %s157
      %s160 = sphi 0, %s159
      %s174 = sphi 0, %s160
      %s182 = sphi 0, %s184
      %s185 = sphi 0, %s182
      %s186 = sphi 0, %s185
      %s202 = sphi 0, %s186
    $region4: #{tpu_custom_call.1} parent=1 // loop_header_branch
      %18 = sbr.rel (%p16) target = $region8
    $region5: #{tpu_custom_call.1} parent=1 // loop_body
      %s20 = ssub.s32 %s15, 1
      %s21 = ssub.s32 %s15, 2
      %s28 = sadd.s32 1, %s23
      %p29 = scmp.ge.s32.totalorder %s28, 2
      %s30 = scalar_select %p29, 0, %s28
      %s31 = sadd.s32 1, %s22
      %s32 = scalar_select %p29, %s31, %s22
      %p33 = scmp.ge.s32.totalorder %s32, 1
      %s34 = scalar_select %p33, 0, %s32
      %s35 = ssub.s32 %s23, %s30
      %s36 = ssub.s32 %s22, %s34
      %s37 = sor.u32 %s35, %s36
      %p38 = scmp.eq.s32.totalorder %s37, 0
      %s40 = sadd.s32 %s39, 1
      %s41 = scalar_select %p38, %s39, %s40
      %p44 = pneg %p38
      %p45 = scmp.eq.s32.totalorder %s15, 1
      %p46 = por %p44, %p45
      %p47 = scmp.ne.s32.totalorder %s39, %s42
      %p48 = scmp.eq.s32.totalorder %s15, 0
      %p49 = por %p47, %p48
      %p50 = scmp.ne.s32.totalorder %s39, %s42
      %p51 = scmp.eq.s32.totalorder %s20, 1
      %p52 = por %p50, %p51
      %p53 = scmp.ne.s32.totalorder %s42, %s43
      %p54 = scmp.eq.s32.totalorder %s20, 0
      %p55 = por %p53, %p54
      %p56 = scmp.ne.s32.totalorder %s42, %s43
      %p57 = scmp.eq.s32.totalorder %s21, 1
      %p58 = por %p56, %p57
      %p60 = scmp.ne.s32.totalorder %s43, %s59
      %p61 = scmp.eq.s32.totalorder %s21, 0
      %p62 = por %p60, %p61
      %s63 = ssub.s32 %s22, %s34
      %p64 = scmp.eq.s32.totalorder %s63, 0
      %s66 = sadd.s32 %s65, 1
      %s67 = scalar_select %p64, %s65, %s66
      %p70 = pneg %p64
      %p71 = scmp.eq.s32.totalorder %s15, 1
      %p72 = por %p70, %p71
      %p73 = scmp.ne.s32.totalorder %s65, %s68
      %p74 = scmp.eq.s32.totalorder %s15, 0
      %p75 = por %p73, %p74
      %p76 = scmp.ne.s32.totalorder %s65, %s68
      %p77 = scmp.eq.s32.totalorder %s20, 1
      %p78 = por %p76, %p77
      %p79 = scmp.ne.s32.totalorder %s68, %s69
      %p80 = scmp.eq.s32.totalorder %s20, 0
      %p81 = por %p79, %p80
      %p82 = scmp.ne.s32.totalorder %s68, %s69
      %p83 = scmp.eq.s32.totalorder %s21, 1
      %p84 = por %p82, %p83
      %p86 = scmp.ne.s32.totalorder %s69, %s85
      %p87 = scmp.eq.s32.totalorder %s21, 0
      %p88 = por %p86, %p87
      %s89 = ssub.s32 %s23, %s30
      %p90 = scmp.eq.s32.totalorder %s89, 0
      %s92 = sadd.s32 %s91, 1
      %s93 = scalar_select %p90, %s91, %s92
      %p96 = pneg %p90
      %p97 = scmp.eq.s32.totalorder %s15, 1
      %p98 = por %p96, %p97
      %p99 = scmp.ne.s32.totalorder %s91, %s94
      %p100 = scmp.eq.s32.totalorder %s15, 0
      %p101 = por %p99, %p100
      %p102 = scmp.ne.s32.totalorder %s91, %s94
      %p103 = scmp.eq.s32.totalorder %s20, 1
      %p104 = por %p102, %p103
      %p105 = scmp.ne.s32.totalorder %s94, %s95
      %p106 = scmp.eq.s32.totalorder %s20, 0
      %p107 = por %p105, %p106
      %p108 = scmp.ne.s32.totalorder %s94, %s95
      %p109 = scmp.eq.s32.totalorder %s21, 1
      %p110 = por %p108, %p109
      %p112 = scmp.ne.s32.totalorder %s95, %s111
      %p113 = scmp.eq.s32.totalorder %s21, 0
      %p114 = por %p112, %p113
      %s116 = sadd.s32 %s115, 1
      %p119 = scmp.eq.s32.totalorder %s15, 1
      %p120 = scmp.ne.s32.totalorder %s115, %s117
      %p121 = scmp.eq.s32.totalorder %s15, 0
      %p122 = por %p120, %p121
      %p123 = scmp.ne.s32.totalorder %s115, %s117
      %p124 = scmp.eq.s32.totalorder %s20, 1
      %p125 = por %p123, %p124
      %p126 = scmp.ne.s32.totalorder %s117, %s118
      %p127 = scmp.eq.s32.totalorder %s20, 0
      %p128 = por %p126, %p127
      %p129 = scmp.ne.s32.totalorder %s117, %s118
      %p130 = scmp.eq.s32.totalorder %s21, 1
      %p131 = por %p129, %p130
      %p133 = scmp.ne.s32.totalorder %s118, %s132
      %p134 = scmp.eq.s32.totalorder %s21, 0
      %p135 = por %p133, %p134
      %s137 = sadd.s32 %s136, 1
      %p140 = scmp.eq.s32.totalorder %s15, 1
      %p141 = scmp.ne.s32.totalorder %s136, %s138
      %p142 = scmp.eq.s32.totalorder %s15, 0
      %p143 = por %p141, %p142
      %p144 = scmp.ne.s32.totalorder %s136, %s138
      %p145 = scmp.eq.s32.totalorder %s20, 1
      %p146 = por %p144, %p145
      %p147 = scmp.ne.s32.totalorder %s138, %s139
      %p148 = scmp.eq.s32.totalorder %s20, 0
      %p149 = por %p147, %p148
      %p150 = scmp.ne.s32.totalorder %s138, %s139
      %p151 = scmp.eq.s32.totalorder %s21, 1
      %p152 = por %p150, %p151
      %p154 = scmp.ne.s32.totalorder %s139, %s153
      %p155 = scmp.eq.s32.totalorder %s21, 0
      %p156 = por %p154, %p155
      %s158 = sadd.s32 %s157, 1
      %p161 = scmp.eq.s32.totalorder %s15, 1
      %p162 = scmp.ne.s32.totalorder %s157, %s159
      %p163 = scmp.eq.s32.totalorder %s15, 0
      %p164 = por %p162, %p163
      %p165 = scmp.ne.s32.totalorder %s157, %s159
      %p166 = scmp.eq.s32.totalorder %s20, 1
      %p167 = por %p165, %p166
      %p168 = scmp.ne.s32.totalorder %s159, %s160
      %p169 = scmp.eq.s32.totalorder %s20, 0
      %p170 = por %p168, %p169
      %p171 = scmp.ne.s32.totalorder %s159, %s160
      %p172 = scmp.eq.s32.totalorder %s21, 1
      %p173 = por %p171, %p172
      %p175 = scmp.ne.s32.totalorder %s160, %s174
      %p176 = scmp.eq.s32.totalorder %s21, 0
      %p177 = por %p175, %p176
      %s178 = ssub.s32 %s23, %s30
      %s179 = ssub.s32 %s22, %s34
      %s180 = sor.u32 %s178, %s179
      %p181 = scmp.eq.s32.totalorder %s180, 0
      %s183 = sadd.s32 %s182, 1
      %s184 = scalar_select %p181, %s182, %s183
      %p187 = pneg %p181
      %p188 = scmp.eq.s32.totalorder %s15, 1
      %p189 = por %p187, %p188
      %p190 = scmp.ne.s32.totalorder %s182, %s185
      %p191 = scmp.eq.s32.totalorder %s15, 0
      %p192 = por %p190, %p191
      %p193 = scmp.ne.s32.totalorder %s182, %s185
      %p194 = scmp.eq.s32.totalorder %s20, 1
      %p195 = por %p193, %p194
      %p196 = scmp.ne.s32.totalorder %s185, %s186
      %p197 = scmp.eq.s32.totalorder %s20, 0
      %p198 = por %p196, %p197
      %p199 = scmp.ne.s32.totalorder %s185, %s186
      %p200 = scmp.eq.s32.totalorder %s21, 1
      %p201 = por %p199, %p200
      %p203 = scmp.ne.s32.totalorder %s186, %s202
      %p204 = scmp.eq.s32.totalorder %s21, 0
      %p205 = por %p203, %p204
      %p206 = scmp.le.s32.totalorder 1, %s15
      %p207 = scmp.lt.s32.totalorder %s15, 3
      %p208 = pnand %p206, %p207
      %p209 = pneg %p208
      // Predicated region
      $region9: #{tpu_custom_call.1} parent=5 // pred_check
        _
      $region10: #{tpu_custom_call.1} parent=5 // pred_check_branch
        %211 = sbr.rel (%p208) target = $region12
      $region11: #{tpu_custom_call.1} parent=5 // pred_region
        %s212 = ssub.s32 %s15, 1
        // Predicated region
        $region13: #{tpu_custom_call.1} parent=11 // pred_check
          %p213 = pneg %p81
        $region14: #{tpu_custom_call.1} parent=11 // pred_check_branch
          %215 = sbr.rel (%p213) target = $region16
        $region15: #{tpu_custom_call.1} parent=11 // pred_region
          %s216 = smul.u32 2, %s24
          %p217 = scmp.lt.s32.totalorder %s216, 1
          %s218 = scalar_select %p217, %s216, 1
          %s219 = smul.addr %s218, 8
          %s220 = scalar_lea.vmem %s1, %s219
          %s221 = smul.u32 2, %s24
        $region16: #{tpu_custom_call.1} parent=11 // pred_fallthru
          _
        // Predicated region
        $region17: #{tpu_custom_call.1} parent=11 // pred_check
          %p222 = pneg %p128
        $region18: #{tpu_custom_call.1} parent=11 // pred_check_branch
          %224 = sbr.rel (%p222) target = $region20
        $region19: #{tpu_custom_call.1} parent=11 // pred_region
          _
        $region20: #{tpu_custom_call.1} parent=11 // pred_fallthru
          _
        // Predicated region
        $region21: #{tpu_custom_call.1} parent=11 // pred_check
          %p225 = pneg %p149
        $region22: #{tpu_custom_call.1} parent=11 // pred_check_branch
          %227 = sbr.rel (%p225) target = $region24
        $region23: #{tpu_custom_call.1} parent=11 // pred_region
          _
        $region24: #{tpu_custom_call.1} parent=11 // pred_fallthru
          _
        // Predicated region
        $region25: #{tpu_custom_call.1} parent=11 // pred_check
          %p228 = pneg %p170
        $region26: #{tpu_custom_call.1} parent=11 // pred_check_branch
          %230 = sbr.rel (%p228) target = $region28
        $region27: #{tpu_custom_call.1} parent=11 // pred_region
          _
        $region28: #{tpu_custom_call.1} parent=11 // pred_fallthru
          _
      $region12: #{tpu_custom_call.1} parent=5 // pred_fallthru
        _
      %p231 = scmp.lt.s32.totalorder %s15, 2
      // Predicated region
      $region29: #{tpu_custom_call.1} parent=5 // pred_check
        %p232 = pneg %p231
      $region30: #{tpu_custom_call.1} parent=5 // pred_check_branch
        %234 = sbr.rel (%p232) target = $region32
      $region31: #{tpu_custom_call.1} parent=5 // pred_region
        // Predicated region
        $region33: #{tpu_custom_call.1} parent=31 // pred_check
          %p235 = pneg %p49
        $region34: #{tpu_custom_call.1} parent=31 // pred_check_branch
          %237 = sbr.rel (%p235) target = $region36
        $region35: #{tpu_custom_call.1} parent=31 // pred_region
          %s238 = smul.u32 2, %s22
          %p239 = scmp.lt.s32.totalorder %s23, 1
          %s240 = scalar_select %p239, %s23, 1
          %p241 = scmp.lt.s32.totalorder %s238, 1
          %s242 = scalar_select %p241, %s238, 1
          %s243 = smul.addr %s240, 2
          %s244 = sadd.s32 %s242, %s243
          %s245 = smul.addr %s244, 4
          %s246 = scalar_lea.vmem %s0, %s245
          %s247 = smul.u32 2, %s22
        $region36: #{tpu_custom_call.1} parent=31 // pred_fallthru
          _
        // Predicated region
        $region37: #{tpu_custom_call.1} parent=31 // pred_check
          %p248 = pneg %p101
        $region38: #{tpu_custom_call.1} parent=31 // pred_check_branch
          %250 = sbr.rel (%p248) target = $region40
        $region39: #{tpu_custom_call.1} parent=31 // pred_region
          %p251 = scmp.lt.s32.totalorder %s23, 1
          %s252 = scalar_select %p251, %s23, 1
          %s253 = smul.addr %s252, 2
          %s254 = smul.addr %s253, 8
          %s255 = scalar_lea.vmem %s2, %s254
        $region40: #{tpu_custom_call.1} parent=31 // pred_fallthru
          _
      $region32: #{tpu_custom_call.1} parent=5 // pred_fallthru
        _
      %p256 = scmp.le.s32.totalorder 1, %s15
      %p257 = scmp.lt.s32.totalorder %s15, 3
      %p258 = pnand %p256, %p257
      %p259 = pneg %p258
      // Predicated region
      $region41: #{tpu_custom_call.1} parent=5 // pred_check
        _
      $region42: #{tpu_custom_call.1} parent=5 // pred_check_branch
        %261 = sbr.rel (%p258) target = $region44
      $region43: #{tpu_custom_call.1} parent=5 // pred_region
        %s262 = ssub.s32 %s15, 1
        %s263 = smul.u32 2, %s24
        %p264 = scmp.lt.s32.totalorder %s25, 1
        %s265 = scalar_select %p264, %s25, 1
        %p266 = scmp.lt.s32.totalorder %s263, 1
        %s267 = scalar_select %p266, %s263, 1
        %s268 = smul.addr %s265, 2
        %s269 = sadd.s32 %s267, %s268
        %s270 = smul.addr %s269, 4
        %s271 = scalar_lea.vmem %s0, %s270
        %p272 = pneg %p55
        %p273 = pneg %p52
        %s274 = smul.u32 2, %s24
        %p275 = scmp.lt.s32.totalorder %s274, 1
        %s276 = scalar_select %p275, %s274, 1
        %s277 = smul.addr %s276, 8
        %s278 = scalar_lea.vmem %s1, %s277
        %p279 = pneg %p81
        %p280 = pneg %p78
        %p281 = scmp.lt.s32.totalorder %s25, 1
        %s282 = scalar_select %p281, %s25, 1
        %s283 = smul.addr %s282, 2
        %s284 = smul.addr %s283, 8
        %s285 = scalar_lea.vmem %s2, %s284
        %p286 = pneg %p107
        %p287 = pneg %p104
        %p288 = pneg %p128
        %p289 = pneg %p125
        %p290 = pneg %p149
        %p291 = pneg %p146
        %p292 = pneg %p170
        %p293 = pneg %p167
        %p294 = pneg %p198
        %p295 = pneg %p195
        %s296 = sand.u32 %s185, 1
        %s297 = scalar_lea.sflag [#allocation4], %s296
        %s298 = sand.u32 %s185, 1
        %s299 = smul.addr %s298, 8
        %s300 = scalar_lea.vmem [#allocation3], %s299
        %s301 = smul.u32 2, %s24
        %p302 = scmp.lt.s32.totalorder %s25, 1
        %s303 = scalar_select %p302, %s25, 1
        %p304 = scmp.lt.s32.totalorder %s301, 1
        %s305 = scalar_select %p304, %s301, 1
        %s306 = smul.addr %s303, 2
        %s307 = sadd.s32 %s305, %s306
        %s308 = smul.addr %s307, 4
        %s309 = scalar_lea.vmem %s0, %s308
        %s310 = smul.u32 2, %s24
        %s311 = smul.u32 2, %s24
        %p312 = scmp.lt.s32.totalorder %s311, 1
        %s313 = scalar_select %p312, %s311, 1
        %s314 = smul.addr %s313, 8
        %s315 = scalar_lea.vmem %s1, %s314
        %s316 = smul.u32 2, %s24
        %p317 = scmp.lt.s32.totalorder %s25, 1
        %s318 = scalar_select %p317, %s25, 1
        %s319 = smul.addr %s318, 2
        %s320 = smul.addr %s319, 8
        %s321 = scalar_lea.vmem %s2, %s320
        %s322 = smul.u32 2, %s24
        %p323 = scmp.eq.s32.totalorder %s25, 0
        // Predicated region
        $region45: #{tpu_custom_call.1} parent=43 // pred_check
          %p324 = pneg %p323
        $region46: #{tpu_custom_call.1} parent=43 // pred_check_branch
          %326 = sbr.rel (%p324) target = $region48
        $region47: #{tpu_custom_call.1} parent=43 // pred_region
          %v327 = vld [vmem:[%s3] sm:$0xff]
          %v328 = vld [vmem:[%s3 + $0x8] sm:$0xff]
          %v329 = vld [vmem:[%s315] sm:$0xff]
          %v330 = vld [vmem:[%s315 + $0x8] sm:$0xff]
          %vm331 = vcmask 64512
          %v333 = vsel %vm331, %v327, 0
          %v336 = vsel %vm331, %v328, 0
          %338 = vmatprep.subr.mxu0 %v330
          %339 = vmatpush1.msra.mxu0 %v329
          %340 = vmatprep.subr.mxu0 0.0
          %341 = vmatpush1.msra.mxu0 0.0
          %342 = vmatprep.subr.mxu0 0.0
          %343 = vmatpush1.msra.mxu0 0.0
          %344 = vmatprep.subr.mxu0 0.0
          %345 = vmatpush1.msra.mxu0 0.0
          %346 = vmatprep.subr.mxu0 0.0
          %347 = vmatpush1.msra.mxu0 0.0
          %348 = vmatprep.subr.mxu0 0.0
          %349 = vmatpush1.msra.mxu0 0.0
          %350 = vmatprep.subr.mxu0 0.0
          %351 = vmatpush1.msra.mxu0 0.0
          %352 = vmatprep.subr.mxu0 0.0
          %353 = vmatpush1.msra.mxu0 0.0
          %354 = vmatprep.subr.mxu0 0.0
          %355 = vmatpush1.msra.mxu0 0.0
          %356 = vmatprep.subr.mxu0 0.0
          %357 = vmatpush1.msra.mxu0 0.0
          %358 = vmatprep.subr.mxu0 0.0
          %359 = vmatpush1.msra.mxu0 0.0
          %360 = vmatprep.subr.mxu0 0.0
          %361 = vmatpush1.msra.mxu0 0.0
          %362 = vmatprep.subr.mxu0 0.0
          %363 = vmatpush1.msra.mxu0 0.0
          %364 = vmatprep.subr.mxu0 0.0
          %365 = vmatpush1.msra.mxu0 0.0
          %366 = vmatprep.subr.mxu0 0.0
          %367 = vmatpush1.msra.mxu0 0.0
          %368 = vmatprep.subr.mxu0 0.0
          %369 = vmatpush1.msra.mxu0 0.0
          %370 = vmatprep.subr.mxu0 0.0
          %371 = vmatpush1.msra.mxu0 0.0
          %372 = vmatprep.subr.mxu0 0.0
          %373 = vmatpush1.msra.mxu0 0.0
          %374 = vmatprep.subr.mxu0 0.0
          %375 = vmatpush1.msra.mxu0 0.0
          %376 = vmatprep.subr.mxu0 0.0
          %377 = vmatpush1.msra.mxu0 0.0
          %378 = vmatprep.subr.mxu0 0.0
          %379 = vmatpush1.msra.mxu0 0.0
          %380 = vmatprep.subr.mxu0 0.0
          %381 = vmatpush1.msra.mxu0 0.0
          %382 = vmatprep.subr.mxu0 0.0
          %383 = vmatpush1.msra.mxu0 0.0
          %384 = vmatprep.subr.mxu0 0.0
          %385 = vmatpush1.msra.mxu0 0.0
          %386 = vmatprep.subr.mxu0 0.0
          %387 = vmatpush1.msra.mxu0 0.0
          %388 = vmatprep.subr.mxu0 0.0
          %389 = vmatpush1.msra.mxu0 0.0
          %390 = vmatprep.subr.mxu0 0.0
          %391 = vmatpush1.msra.mxu0 0.0
          %392 = vmatprep.subr.mxu0 0.0
          %393 = vmatpush1.msra.mxu0 0.0
          %394 = vmatprep.subr.mxu0 0.0
          %395 = vmatpush1.msra.mxu0 0.0
          %396 = vmatprep.subr.mxu0 0.0
          %397 = vmatpush1.msra.mxu0 0.0
          %398 = vmatprep.subr.mxu0 0.0
          %399 = vmatpush1.msra.mxu0 0.0
          %400 = vmatprep.subr.mxu0 0.0
          %401 = vmatpush1.msra.mxu0 0.0
          %402 = vmatprep.mubr.f32.mxu0 0.0
          %403 = vmatmul.mubr.f32.gmra.mrb[0].mxu0 %v333
          %v404 = vpop.f32.mrb[0].mxu0
          %v405 = vadd.f32 0.0, %v404
          %v406 = vpop.f32.mrb[0].mxu0
          %v407 = vadd.f32 0.0, %v406
          %408 = vmatprep.mubr.f32.mxu0 0.0
          %409 = vmatmul.mubr.f32.gmra.mrb[0].mxu0 %v336
          %v410 = vpop.f32.mrb[0].mxu0
          %v411 = vadd.f32 0.0, %v410
          %v412 = vpop.f32.mrb[0].mxu0
          %v413 = vadd.f32 0.0, %v412
          %414 = vdwg.mxu0
          %415 = vst [vmem:[#allocation2] sm:$0xff] %v405
          %416 = vst [vmem:[#allocation2 + $0x8] sm:$0xff] %v407
          %417 = vst [vmem:[#allocation2 + $0x10] sm:$0xff] %v411
          %418 = vst [vmem:[#allocation2 + $0x18] sm:$0xff] %v413
        $region48: #{tpu_custom_call.1} parent=43 // pred_fallthru
          _
        %v419 = vld [vmem:[#allocation2] sm:$0xff]
        %v420 = vld [vmem:[#allocation2 + $0x8] sm:$0xff]
        %v421 = vld [vmem:[#allocation2 + $0x10] sm:$0xff]
        %v422 = vld [vmem:[#allocation2 + $0x18] sm:$0xff]
        %v423 = vld [vmem:[%s321] sm:$0xff]
        %v424 = vld [vmem:[%s321 + $0x8] sm:$0xff]
        %426 = vset.pattern.permute.xlu0 0
        %427 = vperm.xlu0 %426, %v423
        %v428 = vpop.permute.xlu0 %427
        %431 = vset.pattern.permute.xlu0 0
        %432 = vperm.xlu0 %431, %v424
        %v433 = vpop.permute.xlu0 %432
        %v435 = vadd.f32 %v419, %v428
        %v436 = vadd.f32 %v420, %v428
        %v437 = vadd.f32 %v421, %v433
        %v438 = vadd.f32 %v422, %v433
        %v439 = vmax.f32 %v435, 0.0
        %v440 = vmax.f32 %v436, 0.0
        %v441 = vmax.f32 %v437, 0.0
        %v442 = vmax.f32 %v438, 0.0
        %v443 = vld [vmem:[%s4] sm:$0xff]
        %v444 = vld [vmem:[%s5] sm:$0xff]
        %446 = vset.pattern.permute.xlu0 0
        %447 = vperm.xlu0 %446, %v444
        %v448 = vpop.permute.xlu0 %447
        %vm450 = vcmask 130048
        %v452 = vsel %vm450, %v443, 0
        %454 = vmatprep.subr.mxu0 %v440
        %455 = vmatpush1.msra.mxu0 %v439
        %456 = vmatprep.subr.mxu0 %v442
        %457 = vmatpush1.msra.mxu0 %v441
        %458 = vmatprep.subr.mxu0 0.0
        %459 = vmatpush1.msra.mxu0 0.0
        %460 = vmatprep.subr.mxu0 0.0
        %461 = vmatpush1.msra.mxu0 0.0
        %462 = vmatprep.subr.mxu0 0.0
        %463 = vmatpush1.msra.mxu0 0.0
        %464 = vmatprep.subr.mxu0 0.0
        %465 = vmatpush1.msra.mxu0 0.0
        %466 = vmatprep.subr.mxu0 0.0
        %467 = vmatpush1.msra.mxu0 0.0
        %468 = vmatprep.subr.mxu0 0.0
        %469 = vmatpush1.msra.mxu0 0.0
        %470 = vmatprep.subr.mxu0 0.0
        %471 = vmatpush1.msra.mxu0 0.0
        %472 = vmatprep.subr.mxu0 0.0
        %473 = vmatpush1.msra.mxu0 0.0
        %474 = vmatprep.subr.mxu0 0.0
        %475 = vmatpush1.msra.mxu0 0.0
        %476 = vmatprep.subr.mxu0 0.0
        %477 = vmatpush1.msra.mxu0 0.0
        %478 = vmatprep.subr.mxu0 0.0
        %479 = vmatpush1.msra.mxu0 0.0
        %480 = vmatprep.subr.mxu0 0.0
        %481 = vmatpush1.msra.mxu0 0.0
        %482 = vmatprep.subr.mxu0 0.0
        %483 = vmatpush1.msra.mxu0 0.0
        %484 = vmatprep.subr.mxu0 0.0
        %485 = vmatpush1.msra.mxu0 0.0
        %486 = vmatprep.subr.mxu0 0.0
        %487 = vmatpush1.msra.mxu0 0.0
        %488 = vmatprep.subr.mxu0 0.0
        %489 = vmatpush1.msra.mxu0 0.0
        %490 = vmatprep.subr.mxu0 0.0
        %491 = vmatpush1.msra.mxu0 0.0
        %492 = vmatprep.subr.mxu0 0.0
        %493 = vmatpush1.msra.mxu0 0.0
        %494 = vmatprep.subr.mxu0 0.0
        %495 = vmatpush1.msra.mxu0 0.0
        %496 = vmatprep.subr.mxu0 0.0
        %497 = vmatpush1.msra.mxu0 0.0
        %498 = vmatprep.subr.mxu0 0.0
        %499 = vmatpush1.msra.mxu0 0.0
        %500 = vmatprep.subr.mxu0 0.0
        %501 = vmatpush1.msra.mxu0 0.0
        %502 = vmatprep.subr.mxu0 0.0
        %503 = vmatpush1.msra.mxu0 0.0
        %504 = vmatprep.subr.mxu0 0.0
        %505 = vmatpush1.msra.mxu0 0.0
        %506 = vmatprep.subr.mxu0 0.0
        %507 = vmatpush1.msra.mxu0 0.0
        %508 = vmatprep.subr.mxu0 0.0
        %509 = vmatpush1.msra.mxu0 0.0
        %510 = vmatprep.subr.mxu0 0.0
        %511 = vmatpush1.msra.mxu0 0.0
        %512 = vmatprep.subr.mxu0 0.0
        %513 = vmatpush1.msra.mxu0 0.0
        %514 = vmatprep.subr.mxu0 0.0
        %515 = vmatpush1.msra.mxu0 0.0
        %516 = vmatprep.subr.mxu0 0.0
        %517 = vmatpush1.msra.mxu0 0.0
        %518 = vmatprep.mubr.f32.mxu0 0.0
        %519 = vmatmul.mubr.f32.gmra.mrb[0].mxu0 %v452
        %v520 = vpop.f32.mrb[0].mxu0
        %v521 = vadd.f32 %v448, %v520
        %v522 = vpop.f32.mrb[0].mxu0
        %v523 = vadd.f32 %v448, %v522
        %524 = vdwg.mxu0
        %v525 = vld [vmem:[%s309] sm:$0xff]
        %v528 = vcombine.low %v521, %v523
        %v530 = vmul.f32 %v525, %v528
        %v531 = vcombine.high %v521, %v523
        %v533 = vadd.f32 %v530, %v531
        %534 = vst [vmem:[%s300] sm:$0xff] %v533
        %s535 = sand.u32 %s185, 1
        %s536 = scalar_lea.sflag [#allocation4], %s535
        %s537 = sand.u32 %s185, 1
        %s538 = smul.addr %s537, 8
        %s539 = scalar_lea.vmem [#allocation3], %s538
        // Predicated region
        $region49: #{tpu_custom_call.1} parent=43 // pred_check
          %p540 = pneg %p195
        $region50: #{tpu_custom_call.1} parent=43 // pred_check_branch
          %542 = sbr.rel (%p540) target = $region52
        $region51: #{tpu_custom_call.1} parent=43 // pred_region
          %s543 = smul.u32 2, %s24
          %s545 = ssub.s32 128, 128
          %546 = vsyncadd %s536, %s545
          %s547 = smul.addr %s25, 2
          %s548 = sadd.s32 %s543, %s547
          %s549 = smul.addr %s548, 64
          %s550 = scalar_lea.hbm %s6, %s549
          %s552 = sshll.u32 %s539, 4
          %s553 = int_to_ptr.vmem [resolvable:$true] %s552
          %555 = dma.vmem_to_hbm [thread:$0]  %s553, 128, %s550, %s536
        $region52: #{tpu_custom_call.1} parent=43 // pred_fallthru
          _
      $region44: #{tpu_custom_call.1} parent=5 // pred_fallthru
        _
      %p556 = scmp.le.s32.totalorder 2, %s15
      // Predicated region
      $region53: #{tpu_custom_call.1} parent=5 // pred_check
        %p557 = pneg %p556
      $region54: #{tpu_custom_call.1} parent=5 // pred_check_branch
        %559 = sbr.rel (%p557) target = $region56
      $region55: #{tpu_custom_call.1} parent=5 // pred_region
        %s560 = ssub.s32 %s15, 2
        // Predicated region
        $region57: #{tpu_custom_call.1} parent=55 // pred_check
          %p561 = pneg %p201
        $region58: #{tpu_custom_call.1} parent=55 // pred_check_branch
          %563 = sbr.rel (%p561) target = $region60
        $region59: #{tpu_custom_call.1} parent=55 // pred_region
          %s564 = sand.u32 %s186, 1
          %s565 = scalar_lea.sflag [#allocation4], %s564
          %s566 = sand.u32 %s186, 1
          %s567 = smul.addr %s566, 8
          %s568 = scalar_lea.vmem [#allocation3], %s567
          %569 = dma.done %s565, 128
        $region60: #{tpu_custom_call.1} parent=55 // pred_fallthru
          _
      $region56: #{tpu_custom_call.1} parent=5 // pred_fallthru
        _
    $region6: #{tpu_custom_call.1} parent=1 // loop_footer
      %s19 = sadd.s32 1, %s15
    $region7: #{tpu_custom_call.1} parent=1 // loop_footer_branch
      %14 = sbr.rel target = $region3
    $region8: #{tpu_custom_call.1} parent=1 // loop_exit
      _
    %570 = vsyncpa [#allocation4], 1
    %s571 = scalar_lea.sflag [#allocation4], 1
    %572 = vsyncpa %s571, 1

</llo_original>
